<compile_context>
chip_gen: v5e
topology: v5e:2x2
jax: 0.10.0
libtpu: 0.0.40
codegen_flags: <defaults>
</compile_context>

<pallas_src>
import math

import jax
import jax.numpy as jnp
import numpy as np
from jax import lax
from jax.experimental import pallas as pl
from jax.experimental.pallas import tpu as pltpu

HID = 16
LANE = 128


def _dc_kernel(x_ref, w_ref, b_ref, o_ref):
    f32 = jnp.float32
    relu = lambda v: jnp.maximum(v, 0.0)

    x = x_ref[...]                            # (1, TB)

    w1 = w_ref[:, 0:1]                        # (16, 1)   fc1.weight
    w2 = w_ref[:, 1:1 + HID]                  # (16, 16)  fc2.weight
    w3 = w_ref[:, 1 + HID:1 + 2 * HID]        # (16, 16)  fc3.weight
    w4 = w_ref[:, 1 + 2 * HID:2 + 2 * HID]    # (16, 1)   fc4.weight^T

    a = relu(w1 * x + b_ref[:, 0:1])                                       # (16, TB)
    a = relu(jnp.dot(w2, a, preferred_element_type=f32) + b_ref[:, 1:2])   # (16, TB)
    a = relu(jnp.dot(w3, a, preferred_element_type=f32) + b_ref[:, 2:3])   # (16, TB)
    o_ref[...] = (jnp.sum(w4 * a, axis=0, keepdims=True)
                  + b_ref[0:1, 3:4])                                       # (1, TB)


def _round_up(a, b):
    return (a + b - 1) // b * b


def dc_predictor(x, packed):
    """PyTorch DC_Predictor.forward: treats every element of x as a sample.

    Returns (N, 1) with N = x.size.
    """
    W, B = packed
    N = int(math.prod(x.shape))
    xf = x.reshape(-1).astype(jnp.float32)

    n_lane_blocks = _round_up(max(N, 1), LANE) // LANE
    # TB in [128, 1024]; prefer >= 2 grid tiles so both v7x TensorCores get work.
    blocks_per_tile = max(1, min(8, (n_lane_blocks + 1) // 2))
    TB = blocks_per_tile * LANE
    N_pad = _round_up(max(N, 1), TB)

    xT = jnp.pad(xf, (0, N_pad - N)).reshape(1, N_pad)

    grid = (N_pad // TB,)
    out = pl.pallas_call(
        _dc_kernel,
        out_shape=jax.ShapeDtypeStruct((1, N_pad), jnp.float32),
        grid=grid,
        in_specs=[
            pl.BlockSpec((1, TB), lambda i: (0, i)),      # x tile (lane-dense)
            pl.BlockSpec(W.shape, lambda i: (0, 0)),      # packed weights (resident)
            pl.BlockSpec(B.shape, lambda i: (0, 0)),      # packed biases  (resident)
        ],
        out_specs=pl.BlockSpec((1, TB), lambda i: (0, i)),
        compiler_params=pltpu.CompilerParams(
            dimension_semantics=("parallel",)),
    )(xT, W, B)

    return out[0, :N].reshape(N, 1)


# -------------------- deterministic parameter init (PyTorch nn.Linear default) --------------------
def init_raw_params(key):
    keys = iter(jax.random.split(key, 8))

    def U(shape, fan_in):
        bound = 1.0 / np.sqrt(fan_in)
        return jax.random.uniform(next(keys), shape, jnp.float32, -bound, bound)

    return {
        "w1": U((HID, 1), 1),     "b1": U((HID,), 1),
        "w2": U((HID, HID), HID), "b2": U((HID,), HID),
        "w3": U((HID, HID), HID), "b3": U((HID,), HID),
        "w4": U((1, HID), HID),   "b4": U((1,), HID),
    }


def pack_params(raw):
    # Weight slab (16, 34): [fc1.w | fc2.w | fc3.w | fc4.w^T]
    W = jnp.concatenate(
        [raw["w1"], raw["w2"], raw["w3"], raw["w4"].T], axis=1)
    # Bias slab (16, 4): columns [b1, b2, b3, b4 (broadcast)]
    B = jnp.stack(
        [raw["b1"], raw["b2"], raw["b3"],
         jnp.broadcast_to(raw["b4"], (HID,))], axis=1)
    return W, B


# -------------------- pure-JAX reference (PyTorch semantics) --------------------
def reference(x, raw):
    relu = lambda v: jnp.maximum(v, 0.0)
    hp = lax.Precision.HIGHEST
    xf = x.reshape(-1, 1).astype(jnp.float32)
    a = relu(jnp.dot(xf, raw["w1"].T, precision=hp) + raw["b1"])
    a = relu(jnp.dot(a, raw["w2"].T, precision=hp) + raw["b2"])
    a = relu(jnp.dot(a, raw["w3"].T, precision=hp) + raw["b3"])
    return jnp.dot(a, raw["w4"].T, precision=hp) + raw["b4"]     # (N, 1)


if __name__ == "__main__":
    key = jax.random.PRNGKey(0)
    k_par, k_x = jax.random.split(key)

    raw = init_raw_params(k_par)
    packed = pack_params(raw)

    # DC_Predictor.forward reshapes to (-1, 1): any leading shape works.
    x = jax.random.normal(k_x, (2, 4, 16, 16), dtype=jnp.float32)

    out = jax.block_until_ready(dc_predictor(x, packed))
    ref = jax.block_until_ready(reference(x, raw))

    np.testing.assert_allclose(np.asarray(out), np.asarray(ref),
                               rtol=1e-4, atol=1e-4)
    print("KERNEL_OK")
</pallas_src>

<mosaic_0001>
module attributes {stable_mosaic.version = 11 : i64} {
  func.func @_dc_kernel(%arg0: i32, %arg1: memref<1x1024xf32, #tpu.memory_space<vmem>>, %arg2: memref<16x34xf32, #tpu.memory_space<vmem>>, %arg3: memref<16x4xf32, #tpu.memory_space<vmem>>, %arg4: memref<1x1024xf32, #tpu.memory_space<vmem>>) attributes {dimension_semantics = [#tpu.dimension_semantics<parallel>], iteration_bounds = array<i64: 2>, scalar_prefetch = 0 : i64, scratch_operands = 0 : i64, tpu.core_type = #tpu.core_type<tc>, window_params = [{transform_indices = @transform_0, window_bounds = array<i64: 1, 1024>}, {pipeline_mode = #tpu.pipeline_mode<synchronous>, transform_indices = @transform_1, window_bounds = array<i64: 16, 34>}, {pipeline_mode = #tpu.pipeline_mode<synchronous>, transform_indices = @transform_2, window_bounds = array<i64: 16, 4>}, {transform_indices = @transform_3, window_bounds = array<i64: 1, 1024>}]} {
    %c0 = arith.constant 0 : index
    %c0_0 = arith.constant 0 : index
    %0 = vector.load %arg1[%c0, %c0_0] : memref<1x1024xf32, #tpu.memory_space<vmem>>, vector<1x1024xf32>
    %c0_1 = arith.constant 0 : index
    %c0_2 = arith.constant 0 : index
    %1 = vector.load %arg2[%c0_1, %c0_2] : memref<16x34xf32, #tpu.memory_space<vmem>>, vector<16x1xf32>
    %c0_3 = arith.constant 0 : index
    %c1 = arith.constant 1 : index
    %2 = vector.load %arg2[%c0_3, %c1] : memref<16x34xf32, #tpu.memory_space<vmem>>, vector<16x16xf32>
    %c0_4 = arith.constant 0 : index
    %c17 = arith.constant 17 : index
    %3 = vector.load %arg2[%c0_4, %c17] : memref<16x34xf32, #tpu.memory_space<vmem>>, vector<16x16xf32>
    %c0_5 = arith.constant 0 : index
    %c33 = arith.constant 33 : index
    %4 = vector.load %arg2[%c0_5, %c33] : memref<16x34xf32, #tpu.memory_space<vmem>>, vector<16x1xf32>
    %5 = vector.broadcast %1 : vector<16x1xf32> to vector<16x1024xf32>
    %6 = vector.broadcast %0 : vector<1x1024xf32> to vector<16x1024xf32>
    %7 = arith.mulf %5, %6 : vector<16x1024xf32>
    %c0_6 = arith.constant 0 : index
    %c0_7 = arith.constant 0 : index
    %8 = vector.load %arg3[%c0_6, %c0_7] : memref<16x4xf32, #tpu.memory_space<vmem>>, vector<16x1xf32>
    %9 = vector.broadcast %8 : vector<16x1xf32> to vector<16x1024xf32>
    %10 = arith.addf %7, %9 : vector<16x1024xf32>
    %cst = arith.constant 0.000000e+00 : f32
    %11 = vector.broadcast %cst : f32 to vector<16x1024xf32>
    %12 = arith.maximumf %10, %11 : vector<16x1024xf32>
    %cst_8 = arith.constant dense<0.000000e+00> : vector<16x1024xf32>
    %13 = tpu.matmul %2, %12, %cst_8 {dimension_numbers = #tpu.dot_dimension_numbers<[1], [0], [0], [1], [0, 0, 1, 1], [], []>} : vector<16x16xf32>, vector<16x1024xf32>, vector<16x1024xf32> -> vector<16x1024xf32>
    %c0_9 = arith.constant 0 : index
    %c1_10 = arith.constant 1 : index
    %14 = vector.load %arg3[%c0_9, %c1_10] : memref<16x4xf32, #tpu.memory_space<vmem>>, vector<16x1xf32>
    %15 = vector.broadcast %14 : vector<16x1xf32> to vector<16x1024xf32>
    %16 = arith.addf %13, %15 : vector<16x1024xf32>
    %cst_11 = arith.constant 0.000000e+00 : f32
    %17 = vector.broadcast %cst_11 : f32 to vector<16x1024xf32>
    %18 = arith.maximumf %16, %17 : vector<16x1024xf32>
    %cst_12 = arith.constant dense<0.000000e+00> : vector<16x1024xf32>
    %19 = tpu.matmul %3, %18, %cst_12 {dimension_numbers = #tpu.dot_dimension_numbers<[1], [0], [0], [1], [0, 0, 1, 1], [], []>} : vector<16x16xf32>, vector<16x1024xf32>, vector<16x1024xf32> -> vector<16x1024xf32>
    %c0_13 = arith.constant 0 : index
    %c2 = arith.constant 2 : index
    %20 = vector.load %arg3[%c0_13, %c2] : memref<16x4xf32, #tpu.memory_space<vmem>>, vector<16x1xf32>
    %21 = vector.broadcast %20 : vector<16x1xf32> to vector<16x1024xf32>
    %22 = arith.addf %19, %21 : vector<16x1024xf32>
    %cst_14 = arith.constant 0.000000e+00 : f32
    %23 = vector.broadcast %cst_14 : f32 to vector<16x1024xf32>
    %24 = arith.maximumf %22, %23 : vector<16x1024xf32>
    %25 = vector.broadcast %4 : vector<16x1xf32> to vector<16x1024xf32>
    %26 = arith.mulf %25, %24 : vector<16x1024xf32>
    %cst_15 = arith.constant dense<0.000000e+00> : vector<1024xf32>
    %27 = vector.multi_reduction <add>, %26, %cst_15 [0] : vector<16x1024xf32> to vector<1024xf32>
    %28 = vector.shape_cast %27 : vector<1024xf32> to vector<1x1024xf32>
    %c0_16 = arith.constant 0 : index
    %c3 = arith.constant 3 : index
    %29 = vector.load %arg3[%c0_16, %c3] : memref<16x4xf32, #tpu.memory_space<vmem>>, vector<1x1xf32>
    %30 = vector.broadcast %29 : vector<1x1xf32> to vector<1x1024xf32>
    %31 = arith.addf %28, %30 : vector<1x1024xf32>
    %c0_17 = arith.constant 0 : index
    %c0_18 = arith.constant 0 : index
    %32 = vector.load %arg4[%c0_17, %c0_18] : memref<1x1024xf32, #tpu.memory_space<vmem>>, vector<1x1024xf32>
    tpu.vector_store %arg4[%c0_17, %c0_18], %31 {strides = array<i32>} : memref<1x1024xf32, #tpu.memory_space<vmem>>, vector<1x1024xf32>,
    return
  }
  func.func @transform_0(%arg0: i32) -> (i32, i32) {
    %c0_i32 = arith.constant 0 : i32
    %c0_i32_0 = arith.constant 0 : i32
    return %c0_i32, %arg0 : i32, i32
  }
  func.func @transform_1(%arg0: i32) -> (i32, i32) {
    %c0_i32 = arith.constant 0 : i32
    %c0_i32_0 = arith.constant 0 : i32
    %c0_i32_1 = arith.constant 0 : i32
    return %c0_i32, %c0_i32_0 : i32, i32
  }
  func.func @transform_2(%arg0: i32) -> (i32, i32) {
    %c0_i32 = arith.constant 0 : i32
    %c0_i32_0 = arith.constant 0 : i32
    %c0_i32_1 = arith.constant 0 : i32
    return %c0_i32, %c0_i32_0 : i32, i32
  }
  func.func @transform_3(%arg0: i32) -> (i32, i32) {
    %c0_i32 = arith.constant 0 : i32
    %c0_i32_0 = arith.constant 0 : i32
    return %c0_i32, %arg0 : i32, i32
  }
}

</mosaic_0001>

<llo_original>
// kernel: tpu_custom_call.1
$region0: #{tpu_custom_call.1}
  #allocation0 [shape = 'u32[]', space=smem, size = 0x4, offset = 0x4, fixed_abs, tag = 'smem constant byte address 0x4 - core index']
  #allocation1 [shape = 'u32[72,128]{1,0:T(1,128)}', space=vmem, size = 0x9000, scoped, tag = 'internal scratch']
  %s0 = inlined_call_operand.vmem [shape: f32[1,2048], index: 0, kind: input, shape index: {}]
  %s1 = inlined_call_operand.hbm [shape: f32[16,34], index: 1, kind: input, shape index: {}]
  %s2 = inlined_call_operand.vmem [shape: f32[16,4], index: 2, kind: input, shape index: {}]
  %s3 = inlined_call_operand.hbm [shape: f32[1,2048], index: 3, kind: output, shape index: {}]
  %s4 = sld [smem:[#allocation0]]
  $region49: #{tpu_custom_call.1} parent=0
    _
  %s6 = ssub.s32 1, %s4
  %s7 = scalar_select 0, %s6, %s4
  $region1: #{tpu_custom_call.1} parent=0
    #allocation2 [shape = 'u8[8192]{0}', space=vmem, size = 0x2000, scoped, tag = 'input window, operand 1, single buffered']
    #allocation3 [shape = 's32[2]{0}', space=sflag, size = 0x8, scoped, tag = 'scoped memory for tpu_custom_call.1']
    #allocation4 [shape = 's32[2]{0}', space=sflag, size = 0x8, scoped, tag = 'scoped memory for tpu_custom_call.1']
    #allocation5 [shape = 'u8[8192]{0}', space=vmem, size = 0x2000, scoped, tag = 'output window, operand 0']
    %8 = vsyncpa [#allocation3], 0
    %9 = vsyncpa [#allocation4], 0
    %s10 = scalar_lea.sflag [#allocation4], 1
    %11 = vsyncpa %s10, 0
    loop: start=0, step=1, limit=4
    $region2: #{tpu_custom_call.1} parent=1 // loop_pre_header
      _
    $region3: #{tpu_custom_call.1} parent=1 // loop_header
      %s13 = sphi 0, %s17
      %p14 = scmp.ge.s32.totalorder %s13, 4
      %s23 = sphi 0, %s25
      %s26 = sphi 0, %s23
      %s27 = sphi 0, %s26
      %s43 = sphi 0, %s27
      %s47 = sphi 0, %s47
      %s49 = sphi 0, %s47
      %s50 = sphi 0, %s49
      %s64 = sphi 0, %s50
      %s68 = sphi 0, %s68
      %s70 = sphi 0, %s68
      %s71 = sphi 0, %s70
      %s85 = sphi 0, %s71
      %s91 = sphi 0, %s93
      %s94 = sphi 0, %s91
      %s95 = sphi 0, %s94
      %s111 = sphi 0, %s95
    $region4: #{tpu_custom_call.1} parent=1 // loop_header_branch
      %16 = sbr.rel (%p14) target = $region8
    $region5: #{tpu_custom_call.1} parent=1 // loop_body
      %s18 = ssub.s32 %s13, 1
      %s19 = ssub.s32 %s13, 2
      %s20 = sadd.s32 %s13, 1
      %s21 = ssub.s32 %s13, %s20
      %p22 = scmp.eq.s32.totalorder %s21, 0
      %s24 = sadd.s32 %s23, 1
      %s25 = scalar_select %p22, %s23, %s24
      %p28 = pneg %p22
      %p29 = scmp.eq.s32.totalorder %s13, 1
      %p30 = por %p28, %p29
      %p31 = scmp.ne.s32.totalorder %s23, %s26
      %p32 = scmp.eq.s32.totalorder %s13, 0
      %p33 = por %p31, %p32
      %p34 = scmp.ne.s32.totalorder %s23, %s26
      %p35 = scmp.eq.s32.totalorder %s18, 1
      %p36 = por %p34, %p35
      %p37 = scmp.ne.s32.totalorder %s26, %s27
      %p38 = scmp.eq.s32.totalorder %s18, 0
      %p39 = por %p37, %p38
      %p40 = scmp.ne.s32.totalorder %s26, %s27
      %p41 = scmp.eq.s32.totalorder %s19, 1
      %p42 = por %p40, %p41
      %p44 = scmp.ne.s32.totalorder %s27, %s43
      %p45 = scmp.eq.s32.totalorder %s19, 0
      %p46 = por %p44, %p45
      %s48 = sadd.s32 %s47, 1
      %p51 = scmp.eq.s32.totalorder %s13, 1
      %p52 = scmp.ne.s32.totalorder %s47, %s49
      %p53 = scmp.eq.s32.totalorder %s13, 0
      %p54 = por %p52, %p53
      %p55 = scmp.ne.s32.totalorder %s47, %s49
      %p56 = scmp.eq.s32.totalorder %s18, 1
      %p57 = por %p55, %p56
      %p58 = scmp.ne.s32.totalorder %s49, %s50
      %p59 = scmp.eq.s32.totalorder %s18, 0
      %p60 = por %p58, %p59
      %p61 = scmp.ne.s32.totalorder %s49, %s50
      %p62 = scmp.eq.s32.totalorder %s19, 1
      %p63 = por %p61, %p62
      %p65 = scmp.ne.s32.totalorder %s50, %s64
      %p66 = scmp.eq.s32.totalorder %s19, 0
      %p67 = por %p65, %p66
      %s69 = sadd.s32 %s68, 1
      %p72 = scmp.eq.s32.totalorder %s13, 1
      %p73 = scmp.ne.s32.totalorder %s68, %s70
      %p74 = scmp.eq.s32.totalorder %s13, 0
      %p75 = por %p73, %p74
      %p76 = scmp.ne.s32.totalorder %s68, %s70
      %p77 = scmp.eq.s32.totalorder %s18, 1
      %p78 = por %p76, %p77
      %p79 = scmp.ne.s32.totalorder %s70, %s71
      %p80 = scmp.eq.s32.totalorder %s18, 0
      %p81 = por %p79, %p80
      %p82 = scmp.ne.s32.totalorder %s70, %s71
      %p83 = scmp.eq.s32.totalorder %s19, 1
      %p84 = por %p82, %p83
      %p86 = scmp.ne.s32.totalorder %s71, %s85
      %p87 = scmp.eq.s32.totalorder %s19, 0
      %p88 = por %p86, %p87
      %s89 = ssub.s32 %s13, %s20
      %p90 = scmp.eq.s32.totalorder %s89, 0
      %s92 = sadd.s32 %s91, 1
      %s93 = scalar_select %p90, %s91, %s92
      %p96 = pneg %p90
      %p97 = scmp.eq.s32.totalorder %s13, 1
      %p98 = por %p96, %p97
      %p99 = scmp.ne.s32.totalorder %s91, %s94
      %p100 = scmp.eq.s32.totalorder %s13, 0
      %p101 = por %p99, %p100
      %p102 = scmp.ne.s32.totalorder %s91, %s94
      %p103 = scmp.eq.s32.totalorder %s18, 1
      %p104 = por %p102, %p103
      %p105 = scmp.ne.s32.totalorder %s94, %s95
      %p106 = scmp.eq.s32.totalorder %s18, 0
      %p107 = por %p105, %p106
      %p108 = scmp.ne.s32.totalorder %s94, %s95
      %p109 = scmp.eq.s32.totalorder %s19, 1
      %p110 = por %p108, %p109
      %p112 = scmp.ne.s32.totalorder %s95, %s111
      %p113 = scmp.eq.s32.totalorder %s19, 0
      %p114 = por %p112, %p113
      %p115 = scmp.le.s32.totalorder 1, %s13
      %p116 = scmp.lt.s32.totalorder %s13, 3
      %p117 = pnand %p115, %p116
      %p118 = pneg %p117
      // Predicated region
      $region9: #{tpu_custom_call.1} parent=5 // pred_check
        _
      $region10: #{tpu_custom_call.1} parent=5 // pred_check_branch
        %120 = sbr.rel (%p117) target = $region12
      $region11: #{tpu_custom_call.1} parent=5 // pred_region
        %s121 = ssub.s32 %s13, 1
        // Predicated region
        $region13: #{tpu_custom_call.1} parent=11 // pred_check
          %p122 = pneg %p60
        $region14: #{tpu_custom_call.1} parent=11 // pred_check_branch
          %124 = sbr.rel (%p122) target = $region16
        $region15: #{tpu_custom_call.1} parent=11 // pred_region
          %126 = vsyncadd [#allocation3], 0
          %s127 = sshll.u32 %s1, 4
          %s128 = int_to_ptr.hbm [resolvable:$true] %s127
          %s129 = sshll.u32 [#allocation2], 4
          %s130 = int_to_ptr.vmem [resolvable:$true] %s129
          %135 = dma.hbm_to_vmem [thread:$0]  %s128, 256, %s130, [#allocation3], 128, 128, 8
        $region16: #{tpu_custom_call.1} parent=11 // pred_fallthru
          _
        // Predicated region
        $region17: #{tpu_custom_call.1} parent=11 // pred_check
          %p136 = pneg %p81
        $region18: #{tpu_custom_call.1} parent=11 // pred_check_branch
          %138 = sbr.rel (%p136) target = $region20
        $region19: #{tpu_custom_call.1} parent=11 // pred_region
          _
        $region20: #{tpu_custom_call.1} parent=11 // pred_fallthru
          _
      $region12: #{tpu_custom_call.1} parent=5 // pred_fallthru
        _
      %p139 = scmp.lt.s32.totalorder %s13, 2
      // Predicated region
      $region21: #{tpu_custom_call.1} parent=5 // pred_check
        %p140 = pneg %p139
      $region22: #{tpu_custom_call.1} parent=5 // pred_check_branch
        %142 = sbr.rel (%p140) target = $region24
      $region23: #{tpu_custom_call.1} parent=5 // pred_region
        // Predicated region
        $region25: #{tpu_custom_call.1} parent=23 // pred_check
          %p143 = pneg %p33
        $region26: #{tpu_custom_call.1} parent=23 // pred_check_branch
          %145 = sbr.rel (%p143) target = $region28
        $region27: #{tpu_custom_call.1} parent=23 // pred_region
          %s146 = smul.u32 8, %s13
          %p147 = scmp.lt.s32.totalorder %s146, 15
          %s148 = scalar_select %p147, %s146, 15
          %s149 = scalar_lea.vmem %s0, %s148
          %s150 = smul.u32 8, %s13
        $region28: #{tpu_custom_call.1} parent=23 // pred_fallthru
          _
      $region24: #{tpu_custom_call.1} parent=5 // pred_fallthru
        _
      %p151 = scmp.le.s32.totalorder 1, %s13
      %p152 = scmp.lt.s32.totalorder %s13, 3
      %p153 = pnand %p151, %p152
      %p154 = pneg %p153
      // Predicated region
      $region29: #{tpu_custom_call.1} parent=5 // pred_check
        _
      $region30: #{tpu_custom_call.1} parent=5 // pred_check_branch
        %156 = sbr.rel (%p153) target = $region32
      $region31: #{tpu_custom_call.1} parent=5 // pred_region
        %s157 = ssub.s32 %s13, 1
        // Predicated region
        $region33: #{tpu_custom_call.1} parent=31 // pred_check
          %p158 = pneg %p60
        $region34: #{tpu_custom_call.1} parent=31 // pred_check_branch
          %160 = sbr.rel (%p158) target = $region36
        $region35: #{tpu_custom_call.1} parent=31 // pred_region
          %162 = dma.done [#allocation3], 256
        $region36: #{tpu_custom_call.1} parent=31 // pred_fallthru
          _
        %s163 = smul.u32 8, %s18
        %p164 = scmp.lt.s32.totalorder %s163, 15
        %s165 = scalar_select %p164, %s163, 15
        %s166 = scalar_lea.vmem %s0, %s165
        %p167 = pneg %p39
        %p168 = pneg %p36
        %p169 = pneg %p60
        %p170 = pneg %p57
        %p171 = pneg %p81
        %p172 = pneg %p78
        %p173 = pneg %p107
        %p174 = pneg %p104
        %s175 = sand.u32 %s94, 1
        %s176 = scalar_lea.sflag [#allocation4], %s175
        %s177 = sand.u32 %s94, 1
        %s178 = smul.addr %s177, 8
        %s179 = scalar_lea.vmem [#allocation5], %s178
        %s180 = smul.u32 8, %s18
        %p181 = scmp.lt.s32.totalorder %s180, 15
        %s182 = scalar_select %p181, %s180, 15
        %s183 = scalar_lea.vmem %s0, %s182
        %s184 = smul.u32 8, %s18
        %s185 = smul.u32 8, %s18
        %v186 = vld [vmem:[%s183] sm:$0xff]
        %v187 = vld [vmem:[#allocation2] sm:$0xff]
        %v188 = vld [vmem:[#allocation2 + $0x8] sm:$0xff]
        %190 = vset.pattern.permute.xlu0 0
        %191 = vperm.xlu0 %190, %v187
        %v192 = vpop.permute.xlu0 %191
        %195 = vset.pattern.permute.xlu0 0
        %196 = vperm.xlu0 %195, %v188
        %v197 = vpop.permute.xlu0 %196
        %v200 = vperm.slane %v186, 0
        %v201 = vperm.slane %v186, 1
        %v202 = vperm.slane %v186, 2
        %v203 = vperm.slane %v186, 3
        %v204 = vperm.slane %v186, 4
        %v205 = vperm.slane %v186, 5
        %v206 = vperm.slane %v186, 6
        %v207 = vperm.slane %v186, 7
        %v216 = vmul.f32 %v192, %v200
        %v217 = vmul.f32 %v192, %v201
        %v218 = vmul.f32 %v192, %v202
        %v219 = vmul.f32 %v192, %v203
        %v220 = vmul.f32 %v192, %v204
        %v221 = vmul.f32 %v192, %v205
        %v222 = vmul.f32 %v192, %v206
        %v223 = vmul.f32 %v192, %v207
        %v224 = vmul.f32 %v197, %v200
        %v225 = vmul.f32 %v197, %v201
        %v226 = vmul.f32 %v197, %v202
        %v227 = vmul.f32 %v197, %v203
        %v228 = vmul.f32 %v197, %v204
        %v229 = vmul.f32 %v197, %v205
        %v230 = vmul.f32 %v197, %v206
        %v231 = vmul.f32 %v197, %v207
        %v232 = vld [vmem:[%s2] sm:$0xff]
        %v233 = vld [vmem:[%s2 + $0x8] sm:$0xff]
        %235 = vset.pattern.permute.xlu0 0
        %236 = vperm.xlu0 %235, %v232
        %v237 = vpop.permute.xlu0 %236
        %240 = vset.pattern.permute.xlu0 0
        %241 = vperm.xlu0 %240, %v233
        %v242 = vpop.permute.xlu0 %241
        %v244 = vadd.f32 %v216, %v237
        %v245 = vadd.f32 %v217, %v237
        %v246 = vadd.f32 %v218, %v237
        %v247 = vadd.f32 %v219, %v237
        %v248 = vadd.f32 %v220, %v237
        %v249 = vadd.f32 %v221, %v237
        %v250 = vadd.f32 %v222, %v237
        %v251 = vadd.f32 %v223, %v237
        %v252 = vadd.f32 %v224, %v242
        %v253 = vadd.f32 %v225, %v242
        %v254 = vadd.f32 %v226, %v242
        %v255 = vadd.f32 %v227, %v242
        %v256 = vadd.f32 %v228, %v242
        %v257 = vadd.f32 %v229, %v242
        %v258 = vadd.f32 %v230, %v242
        %v259 = vadd.f32 %v231, %v242
        %v260 = vmax.f32 %v244, 0.0
        %v261 = vmax.f32 %v245, 0.0
        %v262 = vmax.f32 %v246, 0.0
        %v263 = vmax.f32 %v247, 0.0
        %v264 = vmax.f32 %v248, 0.0
        %v265 = vmax.f32 %v249, 0.0
        %v266 = vmax.f32 %v250, 0.0
        %v267 = vmax.f32 %v251, 0.0
        %v268 = vmax.f32 %v252, 0.0
        %v269 = vmax.f32 %v253, 0.0
        %v270 = vmax.f32 %v254, 0.0
        %v271 = vmax.f32 %v255, 0.0
        %v272 = vmax.f32 %v256, 0.0
        %v273 = vmax.f32 %v257, 0.0
        %v274 = vmax.f32 %v258, 0.0
        %v275 = vmax.f32 %v259, 0.0
        %276 = vset.pattern.permute.xlu0 1
        %277 = vperm.xlu0 %276, %v232
        %v278 = vpop.permute.xlu0 %277
        %280 = vset.pattern.permute.xlu0 1
        %281 = vperm.xlu0 %280, %v233
        %v282 = vpop.permute.xlu0 %281
        %284 = vrot.lane.b32.xlu0 %v187, 127
        %v285 = vpop.permute.xlu0 %284
        %286 = vrot.lane.b32.xlu0 %v188, 127
        %v287 = vpop.permute.xlu0 %286
        %vm288 = vcmask 130048
        %v289 = vsel %vm288, %v285, 0
        %v291 = vsel %vm288, %v287, 0
        %293 = vmatpush.msra.mxu0 0.0
        %294 = vmatpush.msra.mxu0 0.0
        %295 = vmatpush.msra.mxu0 0.0
        %296 = vmatpush.msra.mxu0 0.0
        %297 = vmatpush.msra.mxu0 0.0
        %298 = vmatpush.msra.mxu0 0.0
        %299 = vmatpush.msra.mxu0 0.0
        %300 = vmatpush.msra.mxu0 0.0
        %301 = vmatpush.msra.mxu0 0.0
        %302 = vmatpush.msra.mxu0 0.0
        %303 = vmatpush.msra.mxu0 0.0
        %304 = vmatpush.msra.mxu0 0.0
        %305 = vmatpush.msra.mxu0 0.0
        %306 = vmatpush.msra.mxu0 0.0
        %307 = vmatpush.msra.mxu0 %v268
        %308 = vmatpush.msra.mxu0 %v260
        %309 = vmatmul.f32.gmra.mxu0 %v289
        %v310 = vpop.f32.mrf.mxu0
        %v311 = vadd.f32 %v278, %v310
        %312 = vmatmul.f32.gmra.mxu0 %v291
        %v313 = vpop.f32.mrf.mxu0
        %v314 = vadd.f32 %v282, %v313
        %315 = vdwg.mxu0
        %316 = vmatpush.msra.mxu0 0.0
        %317 = vmatpush.msra.mxu0 0.0
        %318 = vmatpush.msra.mxu0 0.0
        %319 = vmatpush.msra.mxu0 0.0
        %320 = vmatpush.msra.mxu0 0.0
        %321 = vmatpush.msra.mxu0 0.0
        %322 = vmatpush.msra.mxu0 0.0
        %323 = vmatpush.msra.mxu0 0.0
        %324 = vmatpush.msra.mxu0 0.0
        %325 = vmatpush.msra.mxu0 0.0
        %326 = vmatpush.msra.mxu0 0.0
        %327 = vmatpush.msra.mxu0 0.0
        %328 = vmatpush.msra.mxu0 0.0
        %329 = vmatpush.msra.mxu0 0.0
        %330 = vmatpush.msra.mxu0 %v269
        %331 = vmatpush.msra.mxu0 %v261
        %332 = vmatmul.f32.gmra.mxu0 %v289
        %v333 = vpop.f32.mrf.mxu0
        %v334 = vadd.f32 %v278, %v333
        %335 = vmatmul.f32.gmra.mxu0 %v291
        %v336 = vpop.f32.mrf.mxu0
        %v337 = vadd.f32 %v282, %v336
        %338 = vdwg.mxu0
        %339 = vmatpush.msra.mxu0 0.0
        %340 = vmatpush.msra.mxu0 0.0
        %341 = vmatpush.msra.mxu0 0.0
        %342 = vmatpush.msra.mxu0 0.0
        %343 = vmatpush.msra.mxu0 0.0
        %344 = vmatpush.msra.mxu0 0.0
        %345 = vmatpush.msra.mxu0 0.0
        %346 = vmatpush.msra.mxu0 0.0
        %347 = vmatpush.msra.mxu0 0.0
        %348 = vmatpush.msra.mxu0 0.0
        %349 = vmatpush.msra.mxu0 0.0
        %350 = vmatpush.msra.mxu0 0.0
        %351 = vmatpush.msra.mxu0 0.0
        %352 = vmatpush.msra.mxu0 0.0
        %353 = vmatpush.msra.mxu0 %v270
        %354 = vmatpush.msra.mxu0 %v262
        %355 = vmatmul.f32.gmra.mxu0 %v289
        %v356 = vpop.f32.mrf.mxu0
        %v357 = vadd.f32 %v278, %v356
        %358 = vmatmul.f32.gmra.mxu0 %v291
        %v359 = vpop.f32.mrf.mxu0
        %v360 = vadd.f32 %v282, %v359
        %361 = vdwg.mxu0
        %362 = vmatpush.msra.mxu0 0.0
        %363 = vmatpush.msra.mxu0 0.0
        %364 = vmatpush.msra.mxu0 0.0
        %365 = vmatpush.msra.mxu0 0.0
        %366 = vmatpush.msra.mxu0 0.0
        %367 = vmatpush.msra.mxu0 0.0
        %368 = vmatpush.msra.mxu0 0.0
        %369 = vmatpush.msra.mxu0 0.0
        %370 = vmatpush.msra.mxu0 0.0
        %371 = vmatpush.msra.mxu0 0.0
        %372 = vmatpush.msra.mxu0 0.0
        %373 = vmatpush.msra.mxu0 0.0
        %374 = vmatpush.msra.mxu0 0.0
        %375 = vmatpush.msra.mxu0 0.0
        %376 = vmatpush.msra.mxu0 %v271
        %377 = vmatpush.msra.mxu0 %v263
        %378 = vmatmul.f32.gmra.mxu0 %v289
        %v379 = vpop.f32.mrf.mxu0
        %v380 = vadd.f32 %v278, %v379
        %381 = vmatmul.f32.gmra.mxu0 %v291
        %v382 = vpop.f32.mrf.mxu0
        %v383 = vadd.f32 %v282, %v382
        %384 = vdwg.mxu0
        %385 = vmatpush.msra.mxu0 0.0
        %386 = vmatpush.msra.mxu0 0.0
        %387 = vmatpush.msra.mxu0 0.0
        %388 = vmatpush.msra.mxu0 0.0
        %389 = vmatpush.msra.mxu0 0.0
        %390 = vmatpush.msra.mxu0 0.0
        %391 = vmatpush.msra.mxu0 0.0
        %392 = vmatpush.msra.mxu0 0.0
        %393 = vmatpush.msra.mxu0 0.0
        %394 = vmatpush.msra.mxu0 0.0
        %395 = vmatpush.msra.mxu0 0.0
        %396 = vmatpush.msra.mxu0 0.0
        %397 = vmatpush.msra.mxu0 0.0
        %398 = vmatpush.msra.mxu0 0.0
        %399 = vmatpush.msra.mxu0 %v272
        %400 = vmatpush.msra.mxu0 %v264
        %401 = vmatmul.f32.gmra.mxu0 %v289
        %v402 = vpop.f32.mrf.mxu0
        %v403 = vadd.f32 %v278, %v402
        %404 = vmatmul.f32.gmra.mxu0 %v291
        %v405 = vpop.f32.mrf.mxu0
        %v406 = vadd.f32 %v282, %v405
        %407 = vdwg.mxu0
        %408 = vmatpush.msra.mxu0 0.0
        %409 = vmatpush.msra.mxu0 0.0
        %410 = vmatpush.msra.mxu0 0.0
        %411 = vmatpush.msra.mxu0 0.0
        %412 = vmatpush.msra.mxu0 0.0
        %413 = vmatpush.msra.mxu0 0.0
        %414 = vmatpush.msra.mxu0 0.0
        %415 = vmatpush.msra.mxu0 0.0
        %416 = vmatpush.msra.mxu0 0.0
        %417 = vmatpush.msra.mxu0 0.0
        %418 = vmatpush.msra.mxu0 0.0
        %419 = vmatpush.msra.mxu0 0.0
        %420 = vmatpush.msra.mxu0 0.0
        %421 = vmatpush.msra.mxu0 0.0
        %422 = vmatpush.msra.mxu0 %v273
        %423 = vmatpush.msra.mxu0 %v265
        %424 = vmatmul.f32.gmra.mxu0 %v289
        %v425 = vpop.f32.mrf.mxu0
        %v426 = vadd.f32 %v278, %v425
        %427 = vmatmul.f32.gmra.mxu0 %v291
        %v428 = vpop.f32.mrf.mxu0
        %v429 = vadd.f32 %v282, %v428
        %430 = vdwg.mxu0
        %431 = vmatpush.msra.mxu0 0.0
        %432 = vmatpush.msra.mxu0 0.0
        %433 = vmatpush.msra.mxu0 0.0
        %434 = vmatpush.msra.mxu0 0.0
        %435 = vmatpush.msra.mxu0 0.0
        %436 = vmatpush.msra.mxu0 0.0
        %437 = vmatpush.msra.mxu0 0.0
        %438 = vmatpush.msra.mxu0 0.0
        %439 = vmatpush.msra.mxu0 0.0
        %440 = vmatpush.msra.mxu0 0.0
        %441 = vmatpush.msra.mxu0 0.0
        %442 = vmatpush.msra.mxu0 0.0
        %443 = vmatpush.msra.mxu0 0.0
        %444 = vmatpush.msra.mxu0 0.0
        %445 = vmatpush.msra.mxu0 %v274
        %446 = vmatpush.msra.mxu0 %v266
        %447 = vmatmul.f32.gmra.mxu0 %v289
        %v448 = vpop.f32.mrf.mxu0
        %v449 = vadd.f32 %v278, %v448
        %450 = vmatmul.f32.gmra.mxu0 %v291
        %v451 = vpop.f32.mrf.mxu0
        %v452 = vadd.f32 %v282, %v451
        %453 = vdwg.mxu0
        %454 = vmatpush.msra.mxu0 0.0
        %455 = vmatpush.msra.mxu0 0.0
        %456 = vmatpush.msra.mxu0 0.0
        %457 = vmatpush.msra.mxu0 0.0
        %458 = vmatpush.msra.mxu0 0.0
        %459 = vmatpush.msra.mxu0 0.0
        %460 = vmatpush.msra.mxu0 0.0
        %461 = vmatpush.msra.mxu0 0.0
        %462 = vmatpush.msra.mxu0 0.0
        %463 = vmatpush.msra.mxu0 0.0
        %464 = vmatpush.msra.mxu0 0.0
        %465 = vmatpush.msra.mxu0 0.0
        %466 = vmatpush.msra.mxu0 0.0
        %467 = vmatpush.msra.mxu0 0.0
        %468 = vmatpush.msra.mxu0 %v275
        %469 = vmatpush.msra.mxu0 %v267
        %470 = vmatmul.f32.gmra.mxu0 %v289
        %v471 = vpop.f32.mrf.mxu0
        %v472 = vadd.f32 %v278, %v471
        %473 = vmatmul.f32.gmra.mxu0 %v291
        %v474 = vpop.f32.mrf.mxu0
        %v475 = vadd.f32 %v282, %v474
        %476 = vdwg.mxu0
        %v477 = vmax.f32 %v311, 0.0
        %v478 = vmax.f32 %v334, 0.0
        %v479 = vmax.f32 %v357, 0.0
        %v480 = vmax.f32 %v380, 0.0
        %v481 = vmax.f32 %v403, 0.0
        %v482 = vmax.f32 %v426, 0.0
        %v483 = vmax.f32 %v449, 0.0
        %v484 = vmax.f32 %v472, 0.0
        %v485 = vmax.f32 %v314, 0.0
        %v486 = vmax.f32 %v337, 0.0
        %v487 = vmax.f32 %v360, 0.0
        %v488 = vmax.f32 %v383, 0.0
        %v489 = vmax.f32 %v406, 0.0
        %v490 = vmax.f32 %v429, 0.0
        %v491 = vmax.f32 %v452, 0.0
        %v492 = vmax.f32 %v475, 0.0
        %493 = vset.pattern.permute.xlu0 2
        %494 = vperm.xlu0 %493, %v232
        %v495 = vpop.permute.xlu0 %494
        %497 = vset.pattern.permute.xlu0 2
        %498 = vperm.xlu0 %497, %v233
        %v499 = vpop.permute.xlu0 %498
        %501 = vrot.lane.b32.xlu0 %v187, 111
        %v502 = vpop.permute.xlu0 %501
        %503 = vrot.lane.b32.xlu0 %v188, 111
        %v504 = vpop.permute.xlu0 %503
        %v505 = vsel %vm288, %v502, 0
        %v507 = vsel %vm288, %v504, 0
        %509 = vmatpush.msra.mxu0 0.0
        %510 = vmatpush.msra.mxu0 0.0
        %511 = vmatpush.msra.mxu0 0.0
        %512 = vmatpush.msra.mxu0 0.0
        %513 = vmatpush.msra.mxu0 0.0
        %514 = vmatpush.msra.mxu0 0.0
        %515 = vmatpush.msra.mxu0 0.0
        %516 = vmatpush.msra.mxu0 0.0
        %517 = vmatpush.msra.mxu0 0.0
        %518 = vmatpush.msra.mxu0 0.0
        %519 = vmatpush.msra.mxu0 0.0
        %520 = vmatpush.msra.mxu0 0.0
        %521 = vmatpush.msra.mxu0 0.0
        %522 = vmatpush.msra.mxu0 0.0
        %523 = vmatpush.msra.mxu0 %v485
        %524 = vmatpush.msra.mxu0 %v477
        %525 = vmatmul.f32.gmra.mxu0 %v505
        %v526 = vpop.f32.mrf.mxu0
        %v527 = vadd.f32 %v495, %v526
        %528 = vmatmul.f32.gmra.mxu0 %v507
        %v529 = vpop.f32.mrf.mxu0
        %v530 = vadd.f32 %v499, %v529
        %531 = vdwg.mxu0
        %532 = vmatpush.msra.mxu0 0.0
        %533 = vmatpush.msra.mxu0 0.0
        %534 = vmatpush.msra.mxu0 0.0
        %535 = vmatpush.msra.mxu0 0.0
        %536 = vmatpush.msra.mxu0 0.0
        %537 = vmatpush.msra.mxu0 0.0
        %538 = vmatpush.msra.mxu0 0.0
        %539 = vmatpush.msra.mxu0 0.0
        %540 = vmatpush.msra.mxu0 0.0
        %541 = vmatpush.msra.mxu0 0.0
        %542 = vmatpush.msra.mxu0 0.0
        %543 = vmatpush.msra.mxu0 0.0
        %544 = vmatpush.msra.mxu0 0.0
        %545 = vmatpush.msra.mxu0 0.0
        %546 = vmatpush.msra.mxu0 %v486
        %547 = vmatpush.msra.mxu0 %v478
        %548 = vmatmul.f32.gmra.mxu0 %v505
        %v549 = vpop.f32.mrf.mxu0
        %v550 = vadd.f32 %v495, %v549
        %551 = vmatmul.f32.gmra.mxu0 %v507
        %v552 = vpop.f32.mrf.mxu0
        %v553 = vadd.f32 %v499, %v552
        %554 = vdwg.mxu0
        %555 = vmatpush.msra.mxu0 0.0
        %556 = vmatpush.msra.mxu0 0.0
        %557 = vmatpush.msra.mxu0 0.0
        %558 = vmatpush.msra.mxu0 0.0
        %559 = vmatpush.msra.mxu0 0.0
        %560 = vmatpush.msra.mxu0 0.0
        %561 = vmatpush.msra.mxu0 0.0
        %562 = vmatpush.msra.mxu0 0.0
        %563 = vmatpush.msra.mxu0 0.0
        %564 = vmatpush.msra.mxu0 0.0
        %565 = vmatpush.msra.mxu0 0.0
        %566 = vmatpush.msra.mxu0 0.0
        %567 = vmatpush.msra.mxu0 0.0
        %568 = vmatpush.msra.mxu0 0.0
        %569 = vmatpush.msra.mxu0 %v487
        %570 = vmatpush.msra.mxu0 %v479
        %571 = vmatmul.f32.gmra.mxu0 %v505
        %v572 = vpop.f32.mrf.mxu0
        %v573 = vadd.f32 %v495, %v572
        %574 = vmatmul.f32.gmra.mxu0 %v507
        %v575 = vpop.f32.mrf.mxu0
        %v576 = vadd.f32 %v499, %v575
        %577 = vdwg.mxu0
        %578 = vmatpush.msra.mxu0 0.0
        %579 = vmatpush.msra.mxu0 0.0
        %580 = vmatpush.msra.mxu0 0.0
        %581 = vmatpush.msra.mxu0 0.0
        %582 = vmatpush.msra.mxu0 0.0
        %583 = vmatpush.msra.mxu0 0.0
        %584 = vmatpush.msra.mxu0 0.0
        %585 = vmatpush.msra.mxu0 0.0
        %586 = vmatpush.msra.mxu0 0.0
        %587 = vmatpush.msra.mxu0 0.0
        %588 = vmatpush.msra.mxu0 0.0
        %589 = vmatpush.msra.mxu0 0.0
        %590 = vmatpush.msra.mxu0 0.0
        %591 = vmatpush.msra.mxu0 0.0
        %592 = vmatpush.msra.mxu0 %v488
        %593 = vmatpush.msra.mxu0 %v480
        %594 = vmatmul.f32.gmra.mxu0 %v505
        %v595 = vpop.f32.mrf.mxu0
        %v596 = vadd.f32 %v495, %v595
        %597 = vmatmul.f32.gmra.mxu0 %v507
        %v598 = vpop.f32.mrf.mxu0
        %v599 = vadd.f32 %v499, %v598
        %600 = vdwg.mxu0
        %601 = vmatpush.msra.mxu0 0.0
        %602 = vmatpush.msra.mxu0 0.0
        %603 = vmatpush.msra.mxu0 0.0
        %604 = vmatpush.msra.mxu0 0.0
        %605 = vmatpush.msra.mxu0 0.0
        %606 = vmatpush.msra.mxu0 0.0
        %607 = vmatpush.msra.mxu0 0.0
        %608 = vmatpush.msra.mxu0 0.0
        %609 = vmatpush.msra.mxu0 0.0
        %610 = vmatpush.msra.mxu0 0.0
        %611 = vmatpush.msra.mxu0 0.0
        %612 = vmatpush.msra.mxu0 0.0
        %613 = vmatpush.msra.mxu0 0.0
        %614 = vmatpush.msra.mxu0 0.0
        %615 = vmatpush.msra.mxu0 %v489
        %616 = vmatpush.msra.mxu0 %v481
        %617 = vmatmul.f32.gmra.mxu0 %v505
        %v618 = vpop.f32.mrf.mxu0
        %v619 = vadd.f32 %v495, %v618
        %620 = vmatmul.f32.gmra.mxu0 %v507
        %v621 = vpop.f32.mrf.mxu0
        %v622 = vadd.f32 %v499, %v621
        %623 = vdwg.mxu0
        %624 = vmatpush.msra.mxu0 0.0
        %625 = vmatpush.msra.mxu0 0.0
        %626 = vmatpush.msra.mxu0 0.0
        %627 = vmatpush.msra.mxu0 0.0
        %628 = vmatpush.msra.mxu0 0.0
        %629 = vmatpush.msra.mxu0 0.0
        %630 = vmatpush.msra.mxu0 0.0
        %631 = vmatpush.msra.mxu0 0.0
        %632 = vmatpush.msra.mxu0 0.0
        %633 = vmatpush.msra.mxu0 0.0
        %634 = vmatpush.msra.mxu0 0.0
        %635 = vmatpush.msra.mxu0 0.0
        %636 = vmatpush.msra.mxu0 0.0
        %637 = vmatpush.msra.mxu0 0.0
        %638 = vmatpush.msra.mxu0 %v490
        %639 = vmatpush.msra.mxu0 %v482
        %640 = vmatmul.f32.gmra.mxu0 %v505
        %v641 = vpop.f32.mrf.mxu0
        %v642 = vadd.f32 %v495, %v641
        %643 = vmatmul.f32.gmra.mxu0 %v507
        %v644 = vpop.f32.mrf.mxu0
        %v645 = vadd.f32 %v499, %v644
        %646 = vdwg.mxu0
        %647 = vmatpush.msra.mxu0 0.0
        %648 = vmatpush.msra.mxu0 0.0
        %649 = vmatpush.msra.mxu0 0.0
        %650 = vmatpush.msra.mxu0 0.0
        %651 = vmatpush.msra.mxu0 0.0
        %652 = vmatpush.msra.mxu0 0.0
        %653 = vmatpush.msra.mxu0 0.0
        %654 = vmatpush.msra.mxu0 0.0
        %655 = vmatpush.msra.mxu0 0.0
        %656 = vmatpush.msra.mxu0 0.0
        %657 = vmatpush.msra.mxu0 0.0
        %658 = vmatpush.msra.mxu0 0.0
        %659 = vmatpush.msra.mxu0 0.0
        %660 = vmatpush.msra.mxu0 0.0
        %661 = vmatpush.msra.mxu0 %v491
        %662 = vmatpush.msra.mxu0 %v483
        %663 = vmatmul.f32.gmra.mxu0 %v505
        %v664 = vpop.f32.mrf.mxu0
        %v665 = vadd.f32 %v495, %v664
        %666 = vmatmul.f32.gmra.mxu0 %v507
        %v667 = vpop.f32.mrf.mxu0
        %v668 = vadd.f32 %v499, %v667
        %669 = vdwg.mxu0
        %670 = vmatpush.msra.mxu0 0.0
        %671 = vmatpush.msra.mxu0 0.0
        %672 = vmatpush.msra.mxu0 0.0
        %673 = vmatpush.msra.mxu0 0.0
        %674 = vmatpush.msra.mxu0 0.0
        %675 = vmatpush.msra.mxu0 0.0
        %676 = vmatpush.msra.mxu0 0.0
        %677 = vmatpush.msra.mxu0 0.0
        %678 = vmatpush.msra.mxu0 0.0
        %679 = vmatpush.msra.mxu0 0.0
        %680 = vmatpush.msra.mxu0 0.0
        %681 = vmatpush.msra.mxu0 0.0
        %682 = vmatpush.msra.mxu0 0.0
        %683 = vmatpush.msra.mxu0 0.0
        %684 = vmatpush.msra.mxu0 %v492
        %685 = vmatpush.msra.mxu0 %v484
        %686 = vmatmul.f32.gmra.mxu0 %v505
        %v687 = vpop.f32.mrf.mxu0
        %v688 = vadd.f32 %v495, %v687
        %689 = vmatmul.f32.gmra.mxu0 %v507
        %v690 = vpop.f32.mrf.mxu0
        %v691 = vadd.f32 %v499, %v690
        %692 = vdwg.mxu0
        %v693 = vmax.f32 %v527, 0.0
        %v694 = vmax.f32 %v550, 0.0
        %v695 = vmax.f32 %v573, 0.0
        %v696 = vmax.f32 %v596, 0.0
        %v697 = vmax.f32 %v619, 0.0
        %v698 = vmax.f32 %v642, 0.0
        %v699 = vmax.f32 %v665, 0.0
        %v700 = vmax.f32 %v688, 0.0
        %v701 = vmax.f32 %v530, 0.0
        %v702 = vmax.f32 %v553, 0.0
        %v703 = vmax.f32 %v576, 0.0
        %v704 = vmax.f32 %v599, 0.0
        %v705 = vmax.f32 %v622, 0.0
        %v706 = vmax.f32 %v645, 0.0
        %v707 = vmax.f32 %v668, 0.0
        %v708 = vmax.f32 %v691, 0.0
        %709 = vset.pattern.permute.xlu0 33
        %710 = vperm.xlu0 %709, %v187
        %v711 = vpop.permute.xlu0 %710
        %713 = vset.pattern.permute.xlu0 33
        %714 = vperm.xlu0 %713, %v188
        %v715 = vpop.permute.xlu0 %714
        %v717 = vmul.f32 %v711, %v693
        %v718 = vmul.f32 %v711, %v694
        %v719 = vmul.f32 %v711, %v695
        %v720 = vmul.f32 %v711, %v696
        %v721 = vmul.f32 %v711, %v697
        %v722 = vmul.f32 %v711, %v698
        %v723 = vmul.f32 %v711, %v699
        %v724 = vmul.f32 %v711, %v700
        %v725 = vmul.f32 %v715, %v701
        %v726 = vmul.f32 %v715, %v702
        %v727 = vmul.f32 %v715, %v703
        %v728 = vmul.f32 %v715, %v704
        %v729 = vmul.f32 %v715, %v705
        %v730 = vmul.f32 %v715, %v706
        %v731 = vmul.f32 %v715, %v707
        %v732 = vmul.f32 %v715, %v708
        %v733 = vadd.f32 %v717, %v725
        %v734 = vrot.slane %v733, 4
        %v735 = vadd.f32 %v733, %v734
        %v736 = vrot.slane %v735, 2
        %v737 = vadd.f32 %v735, %v736
        %v738 = vrot.slane %v737, 1
        %v739 = vadd.f32 %v737, %v738
        %v740 = vadd.f32 %v718, %v726
        %v741 = vrot.slane %v740, 4
        %v742 = vadd.f32 %v740, %v741
        %v743 = vrot.slane %v742, 2
        %v744 = vadd.f32 %v742, %v743
        %v745 = vrot.slane %v744, 1
        %v746 = vadd.f32 %v744, %v745
        %v747 = vadd.f32 %v719, %v727
        %v748 = vrot.slane %v747, 4
        %v749 = vadd.f32 %v747, %v748
        %v750 = vrot.slane %v749, 2
        %v751 = vadd.f32 %v749, %v750
        %v752 = vrot.slane %v751, 1
        %v753 = vadd.f32 %v751, %v752
        %v754 = vadd.f32 %v720, %v728
        %v755 = vrot.slane %v754, 4
        %v756 = vadd.f32 %v754, %v755
        %v757 = vrot.slane %v756, 2
        %v758 = vadd.f32 %v756, %v757
        %v759 = vrot.slane %v758, 1
        %v760 = vadd.f32 %v758, %v759
        %v761 = vadd.f32 %v721, %v729
        %v762 = vrot.slane %v761, 4
        %v763 = vadd.f32 %v761, %v762
        %v764 = vrot.slane %v763, 2
        %v765 = vadd.f32 %v763, %v764
        %v766 = vrot.slane %v765, 1
        %v767 = vadd.f32 %v765, %v766
        %v768 = vadd.f32 %v722, %v730
        %v769 = vrot.slane %v768, 4
        %v770 = vadd.f32 %v768, %v769
        %v771 = vrot.slane %v770, 2
        %v772 = vadd.f32 %v770, %v771
        %v773 = vrot.slane %v772, 1
        %v774 = vadd.f32 %v772, %v773
        %v775 = vadd.f32 %v723, %v731
        %v776 = vrot.slane %v775, 4
        %v777 = vadd.f32 %v775, %v776
        %v778 = vrot.slane %v777, 2
        %v779 = vadd.f32 %v777, %v778
        %v780 = vrot.slane %v779, 1
        %v781 = vadd.f32 %v779, %v780
        %v782 = vadd.f32 %v724, %v732
        %v783 = vrot.slane %v782, 4
        %v784 = vadd.f32 %v782, %v783
        %v785 = vrot.slane %v784, 2
        %v786 = vadd.f32 %v784, %v785
        %v787 = vrot.slane %v786, 1
        %v788 = vadd.f32 %v786, %v787
        %v789 = vld [vmem:[%s2] sm:$0x1]
        %791 = vset.pattern.permute.xlu0 3
        %792 = vperm.xlu0 %791, %v789
        %v793 = vpop.permute.xlu0 %792
        %v795 = vadd.f32 %v739, %v793
        %v796 = vadd.f32 %v746, %v793
        %v797 = vadd.f32 %v753, %v793
        %v798 = vadd.f32 %v760, %v793
        %v799 = vadd.f32 %v767, %v793
        %v800 = vadd.f32 %v774, %v793
        %v801 = vadd.f32 %v781, %v793
        %v802 = vadd.f32 %v788, %v793
        %v811 = vrot.slane %v796, 7
        %v812 = vrot.slane %v797, 6
        %v813 = vrot.slane %v798, 5
        %v814 = vrot.slane %v799, 4
        %v815 = vrot.slane %v800, 3
        %v816 = vrot.slane %v801, 2
        %v817 = vrot.slane %v802, 1
        %vm818 = vcmask 1040384
        %v819 = vsel %vm818, %v795, %v811
        %vm820 = vcmask 1042434
        %v821 = vsel %vm820, %v812, %v813
        %vm822 = vcmask 1041408
        %v823 = vsel %vm822, %v819, %v821
        %vm824 = vcmask 1044484
        %v825 = vsel %vm824, %v814, %v815
        %vm826 = vcmask 1046534
        %v827 = vsel %vm826, %v816, %v817
        %vm828 = vcmask 1045508
        %v829 = vsel %vm828, %v825, %v827
        %vm830 = vcmask 1043456
        %v831 = vsel %vm830, %v823, %v829
        %833 = vst [vmem:[%s179] sm:$0xff] %v831
        %s834 = sand.u32 %s94, 1
        %s835 = scalar_lea.sflag [#allocation4], %s834
        %s836 = sand.u32 %s94, 1
        %s837 = smul.addr %s836, 8
        %s838 = scalar_lea.vmem [#allocation5], %s837
        // Predicated region
        $region37: #{tpu_custom_call.1} parent=31 // pred_check
          %p839 = pneg %p104
        $region38: #{tpu_custom_call.1} parent=31 // pred_check_branch
          %841 = sbr.rel (%p839) target = $region40
        $region39: #{tpu_custom_call.1} parent=31 // pred_region
          %s842 = smul.u32 8, %s18
          %844 = vsyncadd %s835, 0
          %s845 = scalar_lea.hbm %s3, %s842
          %s847 = sshll.u32 %s838, 4
          %s848 = int_to_ptr.vmem [resolvable:$true] %s847
          %s849 = sshll.u32 %s845, 4
          %s850 = int_to_ptr.hbm [resolvable:$true] %s849
          %852 = dma.vmem_to_hbm [thread:$0]  %s848, 128, %s850, %s835
        $region40: #{tpu_custom_call.1} parent=31 // pred_fallthru
          _
      $region32: #{tpu_custom_call.1} parent=5 // pred_fallthru
        _
      %p853 = scmp.le.s32.totalorder 2, %s13
      // Predicated region
      $region41: #{tpu_custom_call.1} parent=5 // pred_check
        %p854 = pneg %p853
      $region42: #{tpu_custom_call.1} parent=5 // pred_check_branch
        %856 = sbr.rel (%p854) target = $region44
      $region43: #{tpu_custom_call.1} parent=5 // pred_region
        %s857 = ssub.s32 %s13, 2
        // Predicated region
        $region45: #{tpu_custom_call.1} parent=43 // pred_check
          %p858 = pneg %p110
        $region46: #{tpu_custom_call.1} parent=43 // pred_check_branch
          %860 = sbr.rel (%p858) target = $region48
        $region47: #{tpu_custom_call.1} parent=43 // pred_region
          %s861 = sand.u32 %s95, 1
          %s862 = scalar_lea.sflag [#allocation4], %s861
          %s863 = sand.u32 %s95, 1
          %s864 = smul.addr %s863, 8
          %s865 = scalar_lea.vmem [#allocation5], %s864
          %867 = dma.done %s862, 128
        $region48: #{tpu_custom_call.1} parent=43 // pred_fallthru
          _
      $region44: #{tpu_custom_call.1} parent=5 // pred_fallthru
        _
    $region6: #{tpu_custom_call.1} parent=1 // loop_footer
      %s17 = sadd.s32 1, %s13
    $region7: #{tpu_custom_call.1} parent=1 // loop_footer_branch
      %12 = sbr.rel target = $region3
    $region8: #{tpu_custom_call.1} parent=1 // loop_exit
      _
    %868 = vsyncpa [#allocation3], 1
    %s869 = scalar_lea.sflag [#allocation3], 1
    %870 = vsyncpa %s869, 1
    %871 = vsyncpa [#allocation4], 1
    %s872 = scalar_lea.sflag [#allocation4], 1
    %873 = vsyncpa %s872, 1

</llo_original>
